<compile_context>
chip_gen: v7x
topology: tpu7x:2x2x1
jax: 0.10.0
libtpu: 0.0.40
codegen_flags: <defaults>
</compile_context>

<pallas_src>
import jax
import jax.numpy as jnp
from jax.experimental import pallas as pl
from jax.experimental.pallas import tpu as pltpu


LANE = 1024                  # lane-dense last dim (multiple of 128)
DEFAULT_TILE_ROWS = 2048     # up to 8 MiB f32 per tile (32 MiB live, dbl-buffered in+out)
_MAX_TILE_BYTES = 8 << 20    # hard per-tile cap so 4x tile fits the VMEM limit below
_VMEM_LIMIT_BYTES = 48 << 20  # < 64 MiB v7x physical; plenty of headroom on v5e/v6e


def _affine_kernel(w_ref, b_ref, x_ref, o_ref):
    # w_ref, b_ref: SMEM (1, 1) f32 scalars; x_ref, o_ref: VMEM (TR, LANE) tiles
    # in the input's native dtype.  Upcast in-register (v5e has no bf16 VALU),
    # pure VPU FMA, downcast on store.  Never routed through the MXU.
    x = x_ref[...].astype(jnp.float32)
    o_ref[...] = (x * w_ref[0, 0] + b_ref[0, 0]).astype(o_ref.dtype)


def neural_network_forward(x, weight, bias, *, tile_rows=DEFAULT_TILE_ROWS,
                           min_pallas_elems=1 << 22, force_pallas=False):
    """Forward of NeuralNetwork: linear1(x) with linear1 = nn.Linear(1, 1).

    x:      (N, 1) array (any float dtype; dtype is preserved end-to-end)
    weight: (1, 1) float32  (PyTorch layout: (out_features, in_features))
    bias:   (1,)   float32
    returns (N, 1) array in x.dtype
    """
    orig_shape = x.shape
    dtype = x.dtype
    w2d = jnp.asarray(weight, jnp.float32).reshape(1, 1)
    b2d = jnp.asarray(bias, jnp.float32).reshape(1, 1)
    w = w2d[0, 0]
    b = b2d[0, 0]

    def jnp_affine(v):
        return (v.astype(jnp.float32) * w + b).astype(dtype)

    n = x.size
    if (n < min_pallas_elems and not force_pallas) or n < LANE:
        # Tiny workload: pallas_call launch + DMA setup dwarfs the work.
        return jnp_affine(x)

    # ---- lane-dense slab over the LANE-aligned prefix (no padding pass) -----
    flat = x.reshape(-1)
    rows = n // LANE
    n_main = rows * LANE

    itemsize = jnp.dtype(dtype).itemsize
    sub = max(8, 32 // itemsize)          # min sublane tile: 8 f32 / 16 bf16 / 32 i8
    max_rows = max(sub, (_MAX_TILE_BYTES // (LANE * itemsize)) // sub * sub)
    tr_req = max(sub, -(-int(tile_rows) // sub) * sub)   # round user value up
    tr_req = min(tr_req, max_rows)

    tr = min(tr_req, rows)
    if rows >= 2 * sub:
        # Keep >= 2 grid steps so the "parallel" axis feeds both v7x TCs.
        tr = min(tr, pl.cdiv(rows, 2))
    if tr != rows:
        tr = max(sub, -(-tr // sub) * sub)  # sublane-multiple rule (non-full blocks)
    grid = pl.cdiv(rows, tr)                # boundary block clipped/masked by Pallas

    slab = flat[:n_main].reshape(rows, LANE)

    main_out = pl.pallas_call(
        _affine_kernel,
        out_shape=jax.ShapeDtypeStruct((rows, LANE), dtype),
        grid=(grid,),
        in_specs=[
            pl.BlockSpec(memory_space=pltpu.SMEM),       # weight scalar
            pl.BlockSpec(memory_space=pltpu.SMEM),       # bias scalar
            pl.BlockSpec((tr, LANE), lambda i: (i, 0)),  # x tile
        ],
        out_specs=pl.BlockSpec((tr, LANE), lambda i: (i, 0)),
        compiler_params=pltpu.CompilerParams(
            dimension_semantics=("parallel",),
            vmem_limit_bytes=_VMEM_LIMIT_BYTES),
    )(w2d, b2d, slab)

    if n_main == n:
        out_flat = main_out.reshape(-1)
    else:
        # <LANE leftover elements: fused jnp affine, no pad/slice over the bulk.
        tail_out = jnp_affine(flat[n_main:])
        out_flat = jnp.concatenate([main_out.reshape(-1), tail_out])
    return out_flat.reshape(orig_shape)


if __name__ == "__main__":
    key = jax.random.PRNGKey(0)
    k_w, k_b = jax.random.split(key, 2)

    # Deterministic parameters mimicking nn.Linear(1, 1) default init
    # (uniform(-1/sqrt(fan_in), 1/sqrt(fan_in)) with fan_in = 1).
    weight = jax.random.uniform(k_w, (1, 1), jnp.float32, minval=-1.0, maxval=1.0)
    bias = jax.random.uniform(k_b, (1,), jnp.float32, minval=-1.0, maxval=1.0)

    def ref_fn(v):
        return (v.astype(jnp.float32) @ weight.T + bias).astype(v.dtype)

    # 1) Spec workload: x = arange(100).unsqueeze(1) — tiny, fused fast path.
    x_small = jnp.arange(100, dtype=jnp.float32)[:, None]
    out_small = jax.block_until_ready(neural_network_forward(x_small, weight, bias))
    assert out_small.shape == (100, 1) and out_small.dtype == jnp.float32
    assert jnp.allclose(out_small, ref_fn(x_small), atol=1e-6), "fast-path mismatch"

    # 2) Pallas path, LANE-aligned (40960 elems): default tiling -> 2-step
    #    parallel grid with a clipped boundary block (rows=40, tr=24).
    n_big = 40 * 1024
    x_big = jnp.linspace(-1.0, 1.0, n_big, dtype=jnp.float32)[:, None]
    out_big = jax.block_until_ready(
        neural_network_forward(x_big, weight, bias, force_pallas=True))
    assert out_big.shape == (n_big, 1)
    assert jnp.allclose(out_big, ref_fn(x_big), atol=1e-6), "pallas-path mismatch"

    # 3) Same workload, small explicit tile -> 5-step parallel grid.
    out_big_t8 = jax.block_until_ready(
        neural_network_forward(x_big, weight, bias, force_pallas=True, tile_rows=8))
    assert jnp.allclose(out_big_t8, ref_fn(x_big), atol=1e-6), "tiled-grid mismatch"

    # 4) Non-LANE-aligned N: Pallas prefix + fused jnp tail, no pad/slice passes.
    n_odd = 5 * 1024 + 77
    x_odd = jax.random.normal(key, (n_odd, 1), jnp.float32)
    out_odd = jax.block_until_ready(
        neural_network_forward(x_odd, weight, bias, force_pallas=True))
    assert out_odd.shape == (n_odd, 1)
    assert jnp.allclose(out_odd, ref_fn(x_odd), atol=1e-6), "tail-split mismatch"

    # 5) dtype preservation: bf16 stays bf16 through HBM (f32 only in-register).
    x_bf16 = x_big.astype(jnp.bfloat16)
    out_bf16 = jax.block_until_ready(
        neural_network_forward(x_bf16, weight, bias, force_pallas=True))
    assert out_bf16.dtype == jnp.bfloat16
    assert jnp.allclose(out_bf16.astype(jnp.float32),
                        ref_fn(x_bf16).astype(jnp.float32),
                        atol=2e-2, rtol=2e-2), "bf16-path mismatch"

    print("KERNEL_OK")
</pallas_src>

<mosaic_0001>
module attributes {stable_mosaic.version = 11 : i64} {
  func.func @_affine_kernel(%arg0: i32, %arg1: memref<1x1xf32, #tpu.memory_space<smem>>, %arg2: memref<1x1xf32, #tpu.memory_space<smem>>, %arg3: memref<24x1024xf32, #tpu.memory_space<vmem>>, %arg4: memref<24x1024xf32, #tpu.memory_space<vmem>>) attributes {dimension_semantics = [#tpu.dimension_semantics<parallel>], iteration_bounds = array<i64: 2>, scalar_prefetch = 0 : i64, scratch_operands = 0 : i64, tpu.core_type = #tpu.core_type<tc>, window_params = [{transform_indices = @transform_0, window_bounds = array<i64: 1, 1>}, {transform_indices = @transform_1, window_bounds = array<i64: 1, 1>}, {transform_indices = @transform_2, window_bounds = array<i64: 24, 1024>}, {transform_indices = @transform_3, window_bounds = array<i64: 24, 1024>}]} {
    %c0 = arith.constant 0 : index
    %c0_0 = arith.constant 0 : index
    %0 = vector.load %arg3[%c0, %c0_0] : memref<24x1024xf32, #tpu.memory_space<vmem>>, vector<24x1024xf32>
    %c0_1 = arith.constant 0 : index
    %c0_2 = arith.constant 0 : index
    %1 = memref.load %arg1[%c0_1, %c0_2] : memref<1x1xf32, #tpu.memory_space<smem>>
    %2 = vector.broadcast %1 : f32 to vector<24x1024xf32>
    %3 = arith.mulf %0, %2 : vector<24x1024xf32>
    %c0_3 = arith.constant 0 : index
    %c0_4 = arith.constant 0 : index
    %4 = memref.load %arg2[%c0_3, %c0_4] : memref<1x1xf32, #tpu.memory_space<smem>>
    %5 = vector.broadcast %4 : f32 to vector<24x1024xf32>
    %6 = arith.addf %3, %5 : vector<24x1024xf32>
    %c0_5 = arith.constant 0 : index
    %c0_6 = arith.constant 0 : index
    %7 = vector.load %arg4[%c0_5, %c0_6] : memref<24x1024xf32, #tpu.memory_space<vmem>>, vector<24x1024xf32>
    tpu.vector_store %arg4[%c0_5, %c0_6], %6 {strides = array<i32>} : memref<24x1024xf32, #tpu.memory_space<vmem>>, vector<24x1024xf32>,
    return
  }
  func.func @transform_0(%arg0: i32) -> (i32, i32) {
    %c0_i32 = arith.constant 0 : i32
    %c0_i32_0 = arith.constant 0 : i32
    %c0_i32_1 = arith.constant 0 : i32
    return %c0_i32, %c0_i32_0 : i32, i32
  }
  func.func @transform_1(%arg0: i32) -> (i32, i32) {
    %c0_i32 = arith.constant 0 : i32
    %c0_i32_0 = arith.constant 0 : i32
    %c0_i32_1 = arith.constant 0 : i32
    return %c0_i32, %c0_i32_0 : i32, i32
  }
  func.func @transform_2(%arg0: i32) -> (i32, i32) {
    %c0_i32 = arith.constant 0 : i32
    %c0_i32_0 = arith.constant 0 : i32
    return %arg0, %c0_i32 : i32, i32
  }
  func.func @transform_3(%arg0: i32) -> (i32, i32) {
    %c0_i32 = arith.constant 0 : i32
    %c0_i32_0 = arith.constant 0 : i32
    return %arg0, %c0_i32 : i32, i32
  }
}

</mosaic_0001>

<llo_original>
// kernel: tpu_custom_call.1
$region0: #{tpu_custom_call.1}
  #allocation0 [shape = 'u32[]', space=smem, size = 0x4, offset = 0x4, fixed_abs, tag = 'smem constant byte address 0x4 - core index']
  #allocation1 [shape = 'u32[144,128]{1,0:T(1,128)}', space=vmem, size = 0x12000, scoped, tag = 'internal scratch']
  #allocation2 [shape = 'f32[1,1]{1,0:T(1,128)S(6)}', space=smem, size = 0x200, scoped, tag = 'scoped memory for tpu_custom_call.1']
  #allocation3 [shape = 'f32[1,1]{1,0:T(1,128)S(6)}', space=smem, size = 0x200, scoped, tag = 'scoped memory for tpu_custom_call.1']
  %s0 = inlined_call_operand.<no memory space> [shape: f32[1,1], index: 0, kind: input, shape index: {}]
  %s1 = inlined_call_operand.<no memory space> [shape: f32[1,1], index: 1, kind: input, shape index: {}]
  %s2 = inlined_call_operand.hbm [shape: f32[40,1024], index: 2, kind: input, shape index: {}]
  %s3 = inlined_call_operand.hbm [shape: f32[40,1024], index: 3, kind: output, shape index: {}]
  %s4 = sld [smem:[#allocation0]]
  $region49: #{tpu_custom_call.1} parent=0
    _
  %s6 = ssub.s32 1, %s4
  %s7 = scalar_select 0, %s6, %s4
  %8 = sst [smem:[#allocation2]] %s0
  %9 = sst [smem:[#allocation3]] %s1
  $region1: #{tpu_custom_call.1} parent=0
    #allocation4 [shape = 'u8[196608]{0}', space=vmem, size = 0x30000, scoped, tag = 'input window, operand 2']
    #allocation5 [shape = 's32[2]{0}', space=sflag, size = 0x8, scoped, tag = 'scoped memory for tpu_custom_call.1']
    #allocation6 [shape = 's32[2]{0}', space=sflag, size = 0x8, scoped, tag = 'scoped memory for tpu_custom_call.1']
    #allocation7 [shape = 'u8[196608]{0}', space=vmem, size = 0x30000, scoped, tag = 'output window, operand 0']
    %10 = vsyncpa [#allocation5], 0
    %s11 = scalar_lea.sflag [#allocation5], 1
    %12 = vsyncpa %s11, 0
    %13 = vsyncpa [#allocation6], 0
    %s14 = scalar_lea.sflag [#allocation6], 1
    %15 = vsyncpa %s14, 0
    loop: start=0, step=1, limit=4
    $region2: #{tpu_custom_call.1} parent=1 // loop_pre_header
      _
    $region3: #{tpu_custom_call.1} parent=1 // loop_header
      %s17 = sphi 0, %s21
      %p18 = scmp.ge.s32.totalorder %s17, 4
      %s25 = sphi 0, %s25
      %s27 = sphi 0, %s25
      %s28 = sphi 0, %s27
      %s42 = sphi 0, %s28
      %s46 = sphi 0, %s46
      %s48 = sphi 0, %s46
      %s49 = sphi 0, %s48
      %s63 = sphi 0, %s49
      %s69 = sphi 0, %s71
      %s72 = sphi 0, %s69
      %s73 = sphi 0, %s72
      %s89 = sphi 0, %s73
      %s95 = sphi 0, %s97
      %s98 = sphi 0, %s95
      %s99 = sphi 0, %s98
      %s115 = sphi 0, %s99
    $region4: #{tpu_custom_call.1} parent=1 // loop_header_branch
      %20 = sbr.rel (%p18) target = $region8
    $region5: #{tpu_custom_call.1} parent=1 // loop_body
      %s22 = ssub.s32 %s17, 1
      %s23 = ssub.s32 %s17, 2
      %s24 = sadd.s32 %s17, 1
      %s26 = sadd.s32 %s25, 1
      %p29 = scmp.eq.s32.totalorder %s17, 1
      %p30 = scmp.ne.s32.totalorder %s25, %s27
      %p31 = scmp.eq.s32.totalorder %s17, 0
      %p32 = por %p30, %p31
      %p33 = scmp.ne.s32.totalorder %s25, %s27
      %p34 = scmp.eq.s32.totalorder %s22, 1
      %p35 = por %p33, %p34
      %p36 = scmp.ne.s32.totalorder %s27, %s28
      %p37 = scmp.eq.s32.totalorder %s22, 0
      %p38 = por %p36, %p37
      %p39 = scmp.ne.s32.totalorder %s27, %s28
      %p40 = scmp.eq.s32.totalorder %s23, 1
      %p41 = por %p39, %p40
      %p43 = scmp.ne.s32.totalorder %s28, %s42
      %p44 = scmp.eq.s32.totalorder %s23, 0
      %p45 = por %p43, %p44
      %s47 = sadd.s32 %s46, 1
      %p50 = scmp.eq.s32.totalorder %s17, 1
      %p51 = scmp.ne.s32.totalorder %s46, %s48
      %p52 = scmp.eq.s32.totalorder %s17, 0
      %p53 = por %p51, %p52
      %p54 = scmp.ne.s32.totalorder %s46, %s48
      %p55 = scmp.eq.s32.totalorder %s22, 1
      %p56 = por %p54, %p55
      %p57 = scmp.ne.s32.totalorder %s48, %s49
      %p58 = scmp.eq.s32.totalorder %s22, 0
      %p59 = por %p57, %p58
      %p60 = scmp.ne.s32.totalorder %s48, %s49
      %p61 = scmp.eq.s32.totalorder %s23, 1
      %p62 = por %p60, %p61
      %p64 = scmp.ne.s32.totalorder %s49, %s63
      %p65 = scmp.eq.s32.totalorder %s23, 0
      %p66 = por %p64, %p65
      %s67 = ssub.s32 %s17, %s24
      %p68 = scmp.eq.s32.totalorder %s67, 0
      %s70 = sadd.s32 %s69, 1
      %s71 = scalar_select %p68, %s69, %s70
      %p74 = pneg %p68
      %p75 = scmp.eq.s32.totalorder %s17, 1
      %p76 = por %p74, %p75
      %p77 = scmp.ne.s32.totalorder %s69, %s72
      %p78 = scmp.eq.s32.totalorder %s17, 0
      %p79 = por %p77, %p78
      %p80 = scmp.ne.s32.totalorder %s69, %s72
      %p81 = scmp.eq.s32.totalorder %s22, 1
      %p82 = por %p80, %p81
      %p83 = scmp.ne.s32.totalorder %s72, %s73
      %p84 = scmp.eq.s32.totalorder %s22, 0
      %p85 = por %p83, %p84
      %p86 = scmp.ne.s32.totalorder %s72, %s73
      %p87 = scmp.eq.s32.totalorder %s23, 1
      %p88 = por %p86, %p87
      %p90 = scmp.ne.s32.totalorder %s73, %s89
      %p91 = scmp.eq.s32.totalorder %s23, 0
      %p92 = por %p90, %p91
      %s93 = ssub.s32 %s17, %s24
      %p94 = scmp.eq.s32.totalorder %s93, 0
      %s96 = sadd.s32 %s95, 1
      %s97 = scalar_select %p94, %s95, %s96
      %p100 = pneg %p94
      %p101 = scmp.eq.s32.totalorder %s17, 1
      %p102 = por %p100, %p101
      %p103 = scmp.ne.s32.totalorder %s95, %s98
      %p104 = scmp.eq.s32.totalorder %s17, 0
      %p105 = por %p103, %p104
      %p106 = scmp.ne.s32.totalorder %s95, %s98
      %p107 = scmp.eq.s32.totalorder %s22, 1
      %p108 = por %p106, %p107
      %p109 = scmp.ne.s32.totalorder %s98, %s99
      %p110 = scmp.eq.s32.totalorder %s22, 0
      %p111 = por %p109, %p110
      %p112 = scmp.ne.s32.totalorder %s98, %s99
      %p113 = scmp.eq.s32.totalorder %s23, 1
      %p114 = por %p112, %p113
      %p116 = scmp.ne.s32.totalorder %s99, %s115
      %p117 = scmp.eq.s32.totalorder %s23, 0
      %p118 = por %p116, %p117
      %p119 = scmp.le.s32.totalorder 1, %s17
      %p120 = scmp.lt.s32.totalorder %s17, 3
      %p121 = pnand %p119, %p120
      %p122 = pneg %p121
      // Predicated region
      $region9: #{tpu_custom_call.1} parent=5 // pred_check
        _
      $region10: #{tpu_custom_call.1} parent=5 // pred_check_branch
        %124 = sbr.rel (%p121) target = $region12
      $region11: #{tpu_custom_call.1} parent=5 // pred_region
        %s125 = ssub.s32 %s17, 1
        // Predicated region
        $region13: #{tpu_custom_call.1} parent=11 // pred_check
          %p126 = pneg %p38
        $region14: #{tpu_custom_call.1} parent=11 // pred_check_branch
          %128 = sbr.rel (%p126) target = $region16
        $region15: #{tpu_custom_call.1} parent=11 // pred_region
          _
        $region16: #{tpu_custom_call.1} parent=11 // pred_fallthru
          _
        // Predicated region
        $region17: #{tpu_custom_call.1} parent=11 // pred_check
          %p129 = pneg %p59
        $region18: #{tpu_custom_call.1} parent=11 // pred_check_branch
          %131 = sbr.rel (%p129) target = $region20
        $region19: #{tpu_custom_call.1} parent=11 // pred_region
          _
        $region20: #{tpu_custom_call.1} parent=11 // pred_fallthru
          _
      $region12: #{tpu_custom_call.1} parent=5 // pred_fallthru
        _
      %p132 = scmp.lt.s32.totalorder %s17, 2
      // Predicated region
      $region21: #{tpu_custom_call.1} parent=5 // pred_check
        %p133 = pneg %p132
      $region22: #{tpu_custom_call.1} parent=5 // pred_check_branch
        %135 = sbr.rel (%p133) target = $region24
      $region23: #{tpu_custom_call.1} parent=5 // pred_region
        // Predicated region
        $region25: #{tpu_custom_call.1} parent=23 // pred_check
          %p136 = pneg %p79
        $region26: #{tpu_custom_call.1} parent=23 // pred_check_branch
          %138 = sbr.rel (%p136) target = $region28
        $region27: #{tpu_custom_call.1} parent=23 // pred_region
          %s139 = sand.u32 %s69, 1
          %s140 = scalar_lea.sflag [#allocation5], %s139
          %s141 = sand.u32 %s69, 1
          %s142 = smul.addr %s141, 192
          %s143 = scalar_lea.vmem [#allocation4], %s142
          %s144 = smul.u32 3, %s17
          %s145 = ssub.s32 5, %s144
          %p146 = scmp.lt.s32.totalorder %s145, 3
          %s147 = scalar_select %p146, %s145, 3
          %s148 = smul.u32 128, %s147
          %s149 = smul.u32 %s148, 8
          %s151 = ssub.s32 3072, %s149
          %152 = vsyncadd %s140, %s151
          %p153 = scmp.ne.s32.totalorder 0, %s149
          %s154 = smul.addr %s144, 8
          %s155 = smul.addr %s154, 128
          %s156 = scalar_lea.hbm %s2, %s155
          %s157 = smul.u32 64, %s147
          %s158 = sshll.u32 %s143, 4
          %s159 = int_to_ptr.vmem [resolvable:$true] %s158
          %s160 = sshll.u32 %s157, 4
          %164 = dma.hbm_to_vmem [thread:$0]  (%p153), %s156, %s160, %s159, %s140, 1024, 1024, 64
        $region28: #{tpu_custom_call.1} parent=23 // pred_fallthru
          _
      $region24: #{tpu_custom_call.1} parent=5 // pred_fallthru
        _
      %p165 = scmp.le.s32.totalorder 1, %s17
      %p166 = scmp.lt.s32.totalorder %s17, 3
      %p167 = pnand %p165, %p166
      %p168 = pneg %p167
      // Predicated region
      $region29: #{tpu_custom_call.1} parent=5 // pred_check
        _
      $region30: #{tpu_custom_call.1} parent=5 // pred_check_branch
        %170 = sbr.rel (%p167) target = $region32
      $region31: #{tpu_custom_call.1} parent=5 // pred_region
        %s171 = ssub.s32 %s17, 1
        %s172 = sand.u32 %s72, 1
        %s173 = scalar_lea.sflag [#allocation5], %s172
        %s174 = sand.u32 %s72, 1
        %s175 = smul.addr %s174, 192
        %s176 = scalar_lea.vmem [#allocation4], %s175
        // Predicated region
        $region33: #{tpu_custom_call.1} parent=31 // pred_check
          %p177 = pneg %p85
        $region34: #{tpu_custom_call.1} parent=31 // pred_check_branch
          %179 = sbr.rel (%p177) target = $region36
        $region35: #{tpu_custom_call.1} parent=31 // pred_region
          %180 = dma.done %s173, 3072
        $region36: #{tpu_custom_call.1} parent=31 // pred_fallthru
          _
        %p181 = pneg %p38
        %p182 = pneg %p35
        %p183 = pneg %p59
        %p184 = pneg %p56
        %s185 = sand.u32 %s72, 1
        %s186 = scalar_lea.sflag [#allocation5], %s185
        %s187 = sand.u32 %s72, 1
        %s188 = smul.addr %s187, 192
        %s189 = scalar_lea.vmem [#allocation4], %s188
        %p190 = pneg %p85
        %p191 = pneg %p82
        %p192 = pneg %p111
        %p193 = pneg %p108
        %s194 = sand.u32 %s98, 1
        %s195 = scalar_lea.sflag [#allocation6], %s194
        %s196 = sand.u32 %s98, 1
        %s197 = smul.addr %s196, 192
        %s198 = scalar_lea.vmem [#allocation7], %s197
        %s199 = smul.u32 3, %s22
        %s200 = ssub.s32 5, %s199
        %p201 = scmp.lt.s32.totalorder %s200, 3
        %s202 = scalar_select %p201, %s200, 3
        %s203 = smul.u32 128, %s202
        %s204 = smul.u32 %s203, 8
        %s205 = smul.u32 3, %s22
        %s206 = ssub.s32 5, %s205
        %p207 = scmp.lt.s32.totalorder %s206, 3
        %s208 = scalar_select %p207, %s206, 3
        %s209 = smul.u32 128, %s208
        %s210 = smul.u32 %s209, 8
        %v211 = vld [vmem:[%s176] sm:$0xff]
        %v212 = vld [vmem:[%s176 + $0x8] sm:$0xff]
        %v213 = vld [vmem:[%s176 + $0x10] sm:$0xff]
        %v214 = vld [vmem:[%s176 + $0x18] sm:$0xff]
        %v215 = vld [vmem:[%s176 + $0x20] sm:$0xff]
        %v216 = vld [vmem:[%s176 + $0x28] sm:$0xff]
        %v217 = vld [vmem:[%s176 + $0x30] sm:$0xff]
        %v218 = vld [vmem:[%s176 + $0x38] sm:$0xff]
        %v219 = vld [vmem:[%s176 + $0x40] sm:$0xff]
        %v220 = vld [vmem:[%s176 + $0x48] sm:$0xff]
        %v221 = vld [vmem:[%s176 + $0x50] sm:$0xff]
        %v222 = vld [vmem:[%s176 + $0x58] sm:$0xff]
        %v223 = vld [vmem:[%s176 + $0x60] sm:$0xff]
        %v224 = vld [vmem:[%s176 + $0x68] sm:$0xff]
        %v225 = vld [vmem:[%s176 + $0x70] sm:$0xff]
        %v226 = vld [vmem:[%s176 + $0x78] sm:$0xff]
        %v227 = vld [vmem:[%s176 + $0x80] sm:$0xff]
        %v228 = vld [vmem:[%s176 + $0x88] sm:$0xff]
        %v229 = vld [vmem:[%s176 + $0x90] sm:$0xff]
        %v230 = vld [vmem:[%s176 + $0x98] sm:$0xff]
        %v231 = vld [vmem:[%s176 + $0xa0] sm:$0xff]
        %v232 = vld [vmem:[%s176 + $0xa8] sm:$0xff]
        %v233 = vld [vmem:[%s176 + $0xb0] sm:$0xff]
        %v234 = vld [vmem:[%s176 + $0xb8] sm:$0xff]
        %s235 = sld [smem:[#allocation2]]
        %v236 = vstv %s235
        %v237 = vmul.f32 %v211, %v236
        %v238 = vmul.f32 %v212, %v236
        %v239 = vmul.f32 %v213, %v236
        %v240 = vmul.f32 %v214, %v236
        %v241 = vmul.f32 %v215, %v236
        %v242 = vmul.f32 %v216, %v236
        %v243 = vmul.f32 %v217, %v236
        %v244 = vmul.f32 %v218, %v236
        %v245 = vmul.f32 %v219, %v236
        %v246 = vmul.f32 %v220, %v236
        %v247 = vmul.f32 %v221, %v236
        %v248 = vmul.f32 %v222, %v236
        %v249 = vmul.f32 %v223, %v236
        %v250 = vmul.f32 %v224, %v236
        %v251 = vmul.f32 %v225, %v236
        %v252 = vmul.f32 %v226, %v236
        %v253 = vmul.f32 %v227, %v236
        %v254 = vmul.f32 %v228, %v236
        %v255 = vmul.f32 %v229, %v236
        %v256 = vmul.f32 %v230, %v236
        %v257 = vmul.f32 %v231, %v236
        %v258 = vmul.f32 %v232, %v236
        %v259 = vmul.f32 %v233, %v236
        %v260 = vmul.f32 %v234, %v236
        %s261 = sld [smem:[#allocation3]]
        %v262 = vstv %s261
        %v263 = vadd.f32 %v237, %v262
        %v264 = vadd.f32 %v238, %v262
        %v265 = vadd.f32 %v239, %v262
        %v266 = vadd.f32 %v240, %v262
        %v267 = vadd.f32 %v241, %v262
        %v268 = vadd.f32 %v242, %v262
        %v269 = vadd.f32 %v243, %v262
        %v270 = vadd.f32 %v244, %v262
        %v271 = vadd.f32 %v245, %v262
        %v272 = vadd.f32 %v246, %v262
        %v273 = vadd.f32 %v247, %v262
        %v274 = vadd.f32 %v248, %v262
        %v275 = vadd.f32 %v249, %v262
        %v276 = vadd.f32 %v250, %v262
        %v277 = vadd.f32 %v251, %v262
        %v278 = vadd.f32 %v252, %v262
        %v279 = vadd.f32 %v253, %v262
        %v280 = vadd.f32 %v254, %v262
        %v281 = vadd.f32 %v255, %v262
        %v282 = vadd.f32 %v256, %v262
        %v283 = vadd.f32 %v257, %v262
        %v284 = vadd.f32 %v258, %v262
        %v285 = vadd.f32 %v259, %v262
        %v286 = vadd.f32 %v260, %v262
        %287 = vst [vmem:[%s198] sm:$0xff] %v263
        %288 = vst [vmem:[%s198 + $0x8] sm:$0xff] %v264
        %289 = vst [vmem:[%s198 + $0x10] sm:$0xff] %v265
        %290 = vst [vmem:[%s198 + $0x18] sm:$0xff] %v266
        %291 = vst [vmem:[%s198 + $0x20] sm:$0xff] %v267
        %292 = vst [vmem:[%s198 + $0x28] sm:$0xff] %v268
        %293 = vst [vmem:[%s198 + $0x30] sm:$0xff] %v269
        %294 = vst [vmem:[%s198 + $0x38] sm:$0xff] %v270
        %295 = vst [vmem:[%s198 + $0x40] sm:$0xff] %v271
        %296 = vst [vmem:[%s198 + $0x48] sm:$0xff] %v272
        %297 = vst [vmem:[%s198 + $0x50] sm:$0xff] %v273
        %298 = vst [vmem:[%s198 + $0x58] sm:$0xff] %v274
        %299 = vst [vmem:[%s198 + $0x60] sm:$0xff] %v275
        %300 = vst [vmem:[%s198 + $0x68] sm:$0xff] %v276
        %301 = vst [vmem:[%s198 + $0x70] sm:$0xff] %v277
        %302 = vst [vmem:[%s198 + $0x78] sm:$0xff] %v278
        %303 = vst [vmem:[%s198 + $0x80] sm:$0xff] %v279
        %304 = vst [vmem:[%s198 + $0x88] sm:$0xff] %v280
        %305 = vst [vmem:[%s198 + $0x90] sm:$0xff] %v281
        %306 = vst [vmem:[%s198 + $0x98] sm:$0xff] %v282
        %307 = vst [vmem:[%s198 + $0xa0] sm:$0xff] %v283
        %308 = vst [vmem:[%s198 + $0xa8] sm:$0xff] %v284
        %309 = vst [vmem:[%s198 + $0xb0] sm:$0xff] %v285
        %310 = vst [vmem:[%s198 + $0xb8] sm:$0xff] %v286
        %s311 = sand.u32 %s98, 1
        %s312 = scalar_lea.sflag [#allocation6], %s311
        %s313 = sand.u32 %s98, 1
        %s314 = smul.addr %s313, 192
        %s315 = scalar_lea.vmem [#allocation7], %s314
        // Predicated region
        $region37: #{tpu_custom_call.1} parent=31 // pred_check
          %p316 = pneg %p108
        $region38: #{tpu_custom_call.1} parent=31 // pred_check_branch
          %318 = sbr.rel (%p316) target = $region40
        $region39: #{tpu_custom_call.1} parent=31 // pred_region
          %s319 = smul.u32 3, %s22
          %s320 = ssub.s32 5, %s319
          %p321 = scmp.lt.s32.totalorder %s320, 3
          %s322 = scalar_select %p321, %s320, 3
          %s323 = smul.u32 128, %s322
          %s324 = smul.u32 %s323, 8
          %s326 = ssub.s32 3072, %s324
          %327 = vsyncadd %s312, %s326
          %p328 = scmp.ne.s32.totalorder 0, %s324
          %s329 = smul.addr %s319, 8
          %s330 = smul.addr %s329, 128
          %s331 = scalar_lea.hbm %s3, %s330
          %s332 = smul.u32 64, %s322
          %s333 = sshll.u32 %s315, 4
          %s334 = int_to_ptr.vmem [resolvable:$true] %s333
          %s335 = sshll.u32 %s332, 4
          %339 = dma.vmem_to_hbm [thread:$0]  (%p328), %s334, %s335, %s331, %s312, 1024, 1024, 64
        $region40: #{tpu_custom_call.1} parent=31 // pred_fallthru
          _
      $region32: #{tpu_custom_call.1} parent=5 // pred_fallthru
        _
      %p340 = scmp.le.s32.totalorder 2, %s17
      // Predicated region
      $region41: #{tpu_custom_call.1} parent=5 // pred_check
        %p341 = pneg %p340
      $region42: #{tpu_custom_call.1} parent=5 // pred_check_branch
        %343 = sbr.rel (%p341) target = $region44
      $region43: #{tpu_custom_call.1} parent=5 // pred_region
        %s344 = ssub.s32 %s17, 2
        // Predicated region
        $region45: #{tpu_custom_call.1} parent=43 // pred_check
          %p345 = pneg %p114
        $region46: #{tpu_custom_call.1} parent=43 // pred_check_branch
          %347 = sbr.rel (%p345) target = $region48
        $region47: #{tpu_custom_call.1} parent=43 // pred_region
          %s348 = sand.u32 %s99, 1
          %s349 = scalar_lea.sflag [#allocation6], %s348
          %s350 = sand.u32 %s99, 1
          %s351 = smul.addr %s350, 192
          %s352 = scalar_lea.vmem [#allocation7], %s351
          %353 = dma.done %s349, 3072
        $region48: #{tpu_custom_call.1} parent=43 // pred_fallthru
          _
      $region44: #{tpu_custom_call.1} parent=5 // pred_fallthru
        _
    $region6: #{tpu_custom_call.1} parent=1 // loop_footer
      %s21 = sadd.s32 1, %s17
    $region7: #{tpu_custom_call.1} parent=1 // loop_footer_branch
      %16 = sbr.rel target = $region3
    $region8: #{tpu_custom_call.1} parent=1 // loop_exit
      _
    %354 = vsyncpa [#allocation5], 1
    %s355 = scalar_lea.sflag [#allocation5], 1
    %356 = vsyncpa %s355, 1
    %357 = vsyncpa [#allocation6], 1
    %s358 = scalar_lea.sflag [#allocation6], 1
    %359 = vsyncpa %s358, 1

</llo_original>
